<compile_context>
chip_gen: v6e
topology: v6e:2x2x1
jax: 0.10.0
libtpu: 0.0.40
codegen_flags: <defaults>
</compile_context>

<pallas_src>
import functools

import jax
import jax.numpy as jnp
from jax import lax
from jax.experimental import pallas as pl
from jax.experimental.pallas import tpu as pltpu

_LANE = 128
_SQRT_HALF = 0.7071067811865476


def _round_up(x, m):
    return (x + m - 1) // m * m


def _pad_dim(d):
    # Pad only when it pays off: dims < 128 stay unpadded (full-array-dim blocks are
    # legal and avoid write amplification); exact multiples of 128 need nothing.
    if d < _LANE or d % _LANE == 0:
        return d
    return _round_up(d, _LANE)


def _vmem_capacity_bytes():
    try:
        info = pltpu.get_tpu_info()
        cap = getattr(info, "vmem_capacity_bytes", None)
        if cap:
            return int(cap)
    except Exception:
        pass
    return 64 << 20  # conservative fallback (v7x per-TC size)


def _gelu(x, approximate):
    if approximate:
        # tanh-approx GELU: exp/tanh route through the EUP slot (cheap when VALU binds,
        # recommended on v6e/v7x when profiling shows VALU-bound).
        return jax.nn.gelu(x, approximate=True)
    # torch.nn.GELU() default: exact erf formulation (keep f32 on v5e).
    return 0.5 * x * (1.0 + lax.erf(x * jnp.asarray(_SQRT_HALF, x.dtype)))


def linear_embedding_kernel(x_ref, w1_ref, b1_ref, w2_ref, b2_ref, o_ref, acc_ref,
                            *, approximate_gelu):
    # Grid: (row tiles [parallel], hidden tiles [arbitrary / reduction]).
    # x_ref : [TM, in_p]      w1_ref: [in_p, TH]    b1_ref: [1, TH]
    # w2_ref: [TH, out_p]     b2_ref: [1, out_p]    acc_ref: f32 [TM, out_p]
    kh = pl.program_id(1)

    @pl.when(kh == 0)
    def _():
        acc_ref[...] = jnp.zeros_like(acc_ref)

    x = x_ref[...]
    # layer1 (hidden panel): x @ W1[:, kh] + b1[kh]  (MXU, f32 accumulation)
    h = jnp.dot(x, w1_ref[...], preferred_element_type=jnp.float32)
    h = h + b1_ref[...].astype(jnp.float32)
    # GELU -> dropout (identity at inference).  Elementwise over hidden, so exact per-panel.
    h = _gelu(h, approximate_gelu)
    # layer2 partial: accumulate h_panel @ W2[kh, :] into the resident f32 accumulator.
    acc_ref[...] += jnp.dot(h.astype(w2_ref.dtype), w2_ref[...],
                            preferred_element_type=jnp.float32)

    @pl.when(kh == pl.num_programs(1) - 1)
    def _():
        # + b2 -> dropout (identity at inference) -> store.
        o_ref[...] = (acc_ref[...] + b2_ref[...].astype(jnp.float32)).astype(o_ref.dtype)


def prepare_params(w1, b1, w2, b2):
    """Pad weights/biases once, outside the jitted hot path.

    Weights are stored as [in, out] (y = x @ W + b).  Returns the (possibly padded)
    parameter tuple plus the static true dims for linear_embedding.  Pass bf16 arrays
    here to get the bf16 MXU / half-bandwidth path on v6e/v7x.
    """
    in_dim, hidden = w1.shape
    out_dim = w2.shape[1]
    in_p, hid_p, out_p = _pad_dim(in_dim), _pad_dim(hidden), _pad_dim(out_dim)

    b1 = b1.reshape(1, -1)
    b2 = b2.reshape(1, -1)
    if (in_p, hid_p) != (in_dim, hidden):
        w1 = jnp.pad(w1, ((0, in_p - in_dim), (0, hid_p - hidden)))
    if hid_p != hidden:
        b1 = jnp.pad(b1, ((0, 0), (0, hid_p - hidden)))
    if (hid_p, out_p) != (hidden, out_dim):
        w2 = jnp.pad(w2, ((0, hid_p - hidden), (0, out_p - out_dim)))
    if out_p != out_dim:
        b2 = jnp.pad(b2, ((0, 0), (0, out_p - out_dim)))
    return (w1, b1, w2, b2), (in_dim, hidden, out_dim)


@functools.partial(jax.jit,
                   static_argnames=("dims", "tm", "approximate_gelu", "training"))
def linear_embedding(x, w1p, b1p, w2p, b2p, *, dims, tm=512,
                     approximate_gelu=False, training=False):
    """x: [..., in_dim] -> [..., out_dim].  Params come pre-padded from prepare_params()."""
    assert not training, "TODO(synk): training-mode dropout (pltpu.prng_* mask + 1/(1-p))."
    in_dim, hidden, out_dim = dims
    in_p, hid_p = w1p.shape
    out_p = w2p.shape[1]
    lead = x.shape[:-1]

    x2d = x.reshape(-1, in_dim)
    M = x2d.shape[0]
    if in_p != in_dim:  # only for in_dim >= 128 and not a multiple of 128
        x2d = jnp.pad(x2d, ((0, 0), (0, in_p - in_dim)))

    act_isize = jnp.dtype(x.dtype).itemsize
    wgt_isize = jnp.dtype(w1p.dtype).itemsize

    # Dtype-aware sublane multiple for the row tile (packed-sublane layouts).
    sub = {4: 8, 2: 16, 1: 32}.get(act_isize, 8)

    # ---- generation-aware VMEM budget (v5e/v6e 128 MiB, v7x 64 MiB per TC) ----
    cap = _vmem_capacity_bytes()
    budget = int(cap * 0.45)       # tile-selection budget
    limit_cap = int(cap * 0.75)    # hard ceiling for vmem_limit_bytes (headroom kept)

    def need(tm_, th_, wbuf):
        act = 2 * tm_ * in_p * act_isize           # x tiles (double-buffered)
        outb = 2 * tm_ * out_p * act_isize         # y tiles (double-buffered)
        acc = tm_ * out_p * 4                      # f32 accumulator scratch
        hbuf = 2 * tm_ * th_ * 4                   # f32 h: two live copies around GELU
        ypart = tm_ * out_p * 4                    # f32 dot result before accumulate
        wts = wbuf * (in_p * th_ + th_ * out_p + th_) * wgt_isize + out_p * wgt_isize
        return act + outb + acc + hbuf + ypart + wts

    # ---- row tile ----
    tm_eff = min(_round_up(tm, sub), _round_up(M, sub))
    if M > sub:  # force >=2 row steps so v7x's second TensorCore gets work
        tm_eff = min(tm_eff, _round_up(-(-M // 2), sub))

    # ---- hidden tile / weight residency ----
    th_eff, wbuf = hid_p, 1
    if need(tm_eff, hid_p, 1) > budget:
        tm_floor = min(tm_eff, _round_up(256, sub))
        # 1) modestly shrink tm (never below ~256) with resident weights
        while tm_eff > tm_floor and need(tm_eff, hid_p, 1) > budget:
            tm_eff = max(tm_floor, _round_up(tm_eff // 2, sub))
        if need(tm_eff, hid_p, 1) > budget:
            # 2) stream weight panels along the hidden axis instead of collapsing tm
            cands = ([d for d in range(hid_p, _LANE - 1, -_LANE) if hid_p % d == 0]
                     if hid_p % _LANE == 0 else [])
            for cand in cands:
                if need(tm_eff, cand, 2) <= budget:
                    th_eff, wbuf = cand, 2
                    break
            else:
                if cands:
                    th_eff, wbuf = cands[-1], 2
                # 3) last resort: shrink tm further (in/out-dim tiling is the real fix).
                while tm_eff > sub and need(tm_eff, th_eff, wbuf) > budget:
                    tm_eff = max(sub, _round_up(tm_eff // 2, sub))

    n_row = pl.cdiv(M, tm_eff)
    n_hid = hid_p // th_eff          # th_eff always divides hid_p
    grid = (n_row, n_hid)

    need_final = need(tm_eff, th_eff, wbuf)
    vmem_limit = int(min(limit_cap, max(int(need_final * 1.5) + (4 << 20), 32 << 20)))

    wt_bytes = (in_p * hid_p + hid_p * out_p + hid_p + out_p) * wgt_isize
    cost = pl.CostEstimate(
        flops=2 * M * (in_p * hid_p + hid_p * out_p),
        transcendentals=M * hid_p,
        bytes_accessed=(M * (in_p + out_p) * act_isize
                        + wt_bytes * (1 if n_hid == 1 else n_row)),
    )

    resident = pl.Buffered(1)  # constant index_map -> no double-buffering

    def wspec(shape, index_map):
        if n_hid == 1:
            return pl.BlockSpec(shape, index_map, pipeline_mode=resident)
        return pl.BlockSpec(shape, index_map)  # streamed panels: default double-buffering

    out = pl.pallas_call(
        functools.partial(linear_embedding_kernel, approximate_gelu=approximate_gelu),
        out_shape=jax.ShapeDtypeStruct((M, out_p), x.dtype),
        grid_spec=pltpu.PrefetchScalarGridSpec(
            num_scalar_prefetch=0,
            grid=grid,
            in_specs=[
                pl.BlockSpec((tm_eff, in_p), lambda i, k: (i, 0)),
                wspec((in_p, th_eff), lambda i, k: (0, k)),
                wspec((1, th_eff), lambda i, k: (0, k)),
                wspec((th_eff, out_p), lambda i, k: (k, 0)),
                pl.BlockSpec((1, out_p), lambda i, k: (0, 0), pipeline_mode=resident),
            ],
            out_specs=pl.BlockSpec((tm_eff, out_p), lambda i, k: (i, 0)),
            scratch_shapes=[pltpu.VMEM((tm_eff, out_p), jnp.float32)],
        ),
        compiler_params=pltpu.CompilerParams(
            dimension_semantics=("parallel", "arbitrary"),
            vmem_limit_bytes=vmem_limit,
        ),
        cost_estimate=cost,
    )(x2d, w1p, b1p, w2p, b2p)

    if out_p != out_dim:
        out = out[:, :out_dim]
    return out.reshape(*lead, out_dim)


def init_params(key, in_dim, n_hidden_1, out_dim, dtype=jnp.float32):
    """Deterministic synthetic init (uniform, Linear-style fan-in bound)."""
    k1, k2, k3, k4 = jax.random.split(key, 4)
    bound1 = 1.0 / jnp.sqrt(in_dim)
    bound2 = 1.0 / jnp.sqrt(n_hidden_1)
    # Stored as [in, out] (transpose of PyTorch's [out, in]).
    w1 = jax.random.uniform(k1, (in_dim, n_hidden_1), dtype, -bound1, bound1)
    b1 = jax.random.uniform(k2, (1, n_hidden_1), dtype, -bound1, bound1)
    w2 = jax.random.uniform(k3, (n_hidden_1, out_dim), dtype, -bound2, bound2)
    b2 = jax.random.uniform(k4, (1, out_dim), dtype, -bound2, bound2)
    return w1, b1, w2, b2


if __name__ == "__main__":
    batch, seq = 2, 8
    in_dim, n_hidden_1, out_dim = 16, 32, 16
    dropout_p = 0.1  # identity at inference

    key = jax.random.PRNGKey(0)
    kx, kp = jax.random.split(key)
    x = jax.random.normal(kx, (batch, seq, in_dim), jnp.float32)
    w1, b1, w2, b2 = init_params(kp, in_dim, n_hidden_1, out_dim)

    # Padding hoisted out of the per-call hot path (no-op here: all dims < 128).
    params, dims = prepare_params(w1, b1, w2, b2)

    y = linear_embedding(x, *params, dims=dims)
    jax.block_until_ready(y)

    # Reference check in plain JAX (exact erf GELU, matching torch.nn.GELU()).
    h_ref = x @ w1 + b1[0]
    h_ref = 0.5 * h_ref * (1.0 + lax.erf(h_ref / jnp.sqrt(2.0)))
    y_ref = h_ref @ w2 + b2[0]
    assert y.shape == (batch, seq, out_dim)
    assert jnp.allclose(y, y_ref, atol=1e-4, rtol=1e-4), float(jnp.max(jnp.abs(y - y_ref)))

    print("KERNEL_OK")
</pallas_src>

<mosaic_0001>
module attributes {stable_mosaic.version = 11 : i64} {
  func.func @linear_embedding_kernel(%arg0: i32, %arg1: i32, %arg2: memref<8x16xf32, #tpu.memory_space<vmem>>, %arg3: memref<16x32xf32, #tpu.memory_space<vmem>>, %arg4: memref<1x32xf32, #tpu.memory_space<vmem>>, %arg5: memref<32x16xf32, #tpu.memory_space<vmem>>, %arg6: memref<1x16xf32, #tpu.memory_space<vmem>>, %arg7: memref<8x16xf32, #tpu.memory_space<vmem>>, %arg8: memref<8x16xf32, #tpu.memory_space<vmem>>) attributes {dimension_semantics = [#tpu.dimension_semantics<parallel>, #tpu.dimension_semantics<arbitrary>], iteration_bounds = array<i64: 2, 1>, scalar_prefetch = 0 : i64, scratch_operands = 1 : i64, tpu.core_type = #tpu.core_type<tc>, window_params = [{transform_indices = @transform_0, window_bounds = array<i64: 8, 16>}, {pipeline_mode = #tpu.pipeline_mode<synchronous>, transform_indices = @transform_1, window_bounds = array<i64: 16, 32>}, {pipeline_mode = #tpu.pipeline_mode<synchronous>, transform_indices = @transform_2, window_bounds = array<i64: 1, 32>}, {pipeline_mode = #tpu.pipeline_mode<synchronous>, transform_indices = @transform_3, window_bounds = array<i64: 32, 16>}, {pipeline_mode = #tpu.pipeline_mode<synchronous>, transform_indices = @transform_4, window_bounds = array<i64: 1, 16>}, {transform_indices = @transform_5, window_bounds = array<i64: 8, 16>}]} {
    %c0_i32 = arith.constant 0 : i32
    %0 = arith.cmpi eq, %arg1, %c0_i32 : i32
    %1 = arith.extui %0 : i1 to i32
    %c0_i32_0 = arith.constant 0 : i32
    %2 = arith.cmpi ne, %1, %c0_i32_0 : i32
    scf.if %2 {
      %cst_18 = arith.constant 0.000000e+00 : f32
      %25 = vector.broadcast %cst_18 : f32 to vector<8x16xf32>
      %c0_19 = arith.constant 0 : index
      %c0_20 = arith.constant 0 : index
      %26 = vector.load %arg8[%c0_19, %c0_20] : memref<8x16xf32, #tpu.memory_space<vmem>>, vector<8x16xf32>
      tpu.vector_store %arg8[%c0_19, %c0_20], %25 {strides = array<i32>} : memref<8x16xf32, #tpu.memory_space<vmem>>, vector<8x16xf32>,
    } else {
    }
    %c0 = arith.constant 0 : index
    %c0_1 = arith.constant 0 : index
    %3 = vector.load %arg2[%c0, %c0_1] : memref<8x16xf32, #tpu.memory_space<vmem>>, vector<8x16xf32>
    %c0_2 = arith.constant 0 : index
    %c0_3 = arith.constant 0 : index
    %4 = vector.load %arg3[%c0_2, %c0_3] : memref<16x32xf32, #tpu.memory_space<vmem>>, vector<16x32xf32>
    %cst = arith.constant dense<0.000000e+00> : vector<8x32xf32>
    %5 = tpu.matmul %3, %4, %cst {dimension_numbers = #tpu.dot_dimension_numbers<[1], [0], [0], [1], [0, 0, 1, 1], [], []>} : vector<8x16xf32>, vector<16x32xf32>, vector<8x32xf32> -> vector<8x32xf32>
    %c0_4 = arith.constant 0 : index
    %c0_5 = arith.constant 0 : index
    %6 = vector.load %arg4[%c0_4, %c0_5] : memref<1x32xf32, #tpu.memory_space<vmem>>, vector<1x32xf32>
    %7 = vector.broadcast %6 : vector<1x32xf32> to vector<8x32xf32>
    %8 = arith.addf %5, %7 : vector<8x32xf32>
    %cst_6 = arith.constant 5.000000e-01 : f32
    %9 = vector.broadcast %cst_6 : f32 to vector<8x32xf32>
    %10 = arith.mulf %9, %8 : vector<8x32xf32>
    %cst_7 = arith.constant 0.707106769 : f32
    %11 = vector.broadcast %cst_7 : f32 to vector<8x32xf32>
    %12 = arith.mulf %8, %11 : vector<8x32xf32>
    %13 = math.erf %12 : vector<8x32xf32>
    %cst_8 = arith.constant 1.000000e+00 : f32
    %14 = vector.broadcast %cst_8 : f32 to vector<8x32xf32>
    %15 = arith.addf %14, %13 : vector<8x32xf32>
    %16 = arith.mulf %10, %15 : vector<8x32xf32>
    %c0_9 = arith.constant 0 : index
    %c0_10 = arith.constant 0 : index
    %17 = vector.load %arg8[%c0_9, %c0_10] : memref<8x16xf32, #tpu.memory_space<vmem>>, vector<8x16xf32>
    %c0_11 = arith.constant 0 : index
    %c0_12 = arith.constant 0 : index
    %18 = vector.load %arg5[%c0_11, %c0_12] : memref<32x16xf32, #tpu.memory_space<vmem>>, vector<32x16xf32>
    %cst_13 = arith.constant dense<0.000000e+00> : vector<8x16xf32>
    %19 = tpu.matmul %16, %18, %cst_13 {dimension_numbers = #tpu.dot_dimension_numbers<[1], [0], [0], [1], [0, 0, 1, 1], [], []>} : vector<8x32xf32>, vector<32x16xf32>, vector<8x16xf32> -> vector<8x16xf32>
    %20 = arith.addf %17, %19 : vector<8x16xf32>
    %c0_14 = arith.constant 0 : index
    %c0_15 = arith.constant 0 : index
    %21 = vector.load %arg8[%c0_14, %c0_15] : memref<8x16xf32, #tpu.memory_space<vmem>>, vector<8x16xf32>
    tpu.vector_store %arg8[%c0_14, %c0_15], %20 {strides = array<i32>} : memref<8x16xf32, #tpu.memory_space<vmem>>, vector<8x16xf32>,
    %c0_i32_16 = arith.constant 0 : i32
    %22 = arith.cmpi eq, %arg1, %c0_i32_16 : i32
    %23 = arith.extui %22 : i1 to i32
    %c0_i32_17 = arith.constant 0 : i32
    %24 = arith.cmpi ne, %23, %c0_i32_17 : i32
    scf.if %24 {
      %c0_18 = arith.constant 0 : index
      %c0_19 = arith.constant 0 : index
      %25 = vector.load %arg8[%c0_18, %c0_19] : memref<8x16xf32, #tpu.memory_space<vmem>>, vector<8x16xf32>
      %c0_20 = arith.constant 0 : index
      %c0_21 = arith.constant 0 : index
      %26 = vector.load %arg6[%c0_20, %c0_21] : memref<1x16xf32, #tpu.memory_space<vmem>>, vector<1x16xf32>
      %27 = vector.broadcast %26 : vector<1x16xf32> to vector<8x16xf32>
      %28 = arith.addf %25, %27 : vector<8x16xf32>
      %c0_22 = arith.constant 0 : index
      %c0_23 = arith.constant 0 : index
      %29 = vector.load %arg7[%c0_22, %c0_23] : memref<8x16xf32, #tpu.memory_space<vmem>>, vector<8x16xf32>
      tpu.vector_store %arg7[%c0_22, %c0_23], %28 {strides = array<i32>} : memref<8x16xf32, #tpu.memory_space<vmem>>, vector<8x16xf32>,
    } else {
    }
    return
  }
  func.func @transform_0(%arg0: i32, %arg1: i32) -> (i32, i32) {
    %c0_i32 = arith.constant 0 : i32
    %c0_i32_0 = arith.constant 0 : i32
    return %arg0, %c0_i32 : i32, i32
  }
  func.func @transform_1(%arg0: i32, %arg1: i32) -> (i32, i32) {
    %c0_i32 = arith.constant 0 : i32
    %c0_i32_0 = arith.constant 0 : i32
    return %c0_i32, %arg1 : i32, i32
  }
  func.func @transform_2(%arg0: i32, %arg1: i32) -> (i32, i32) {
    %c0_i32 = arith.constant 0 : i32
    %c0_i32_0 = arith.constant 0 : i32
    return %c0_i32, %arg1 : i32, i32
  }
  func.func @transform_3(%arg0: i32, %arg1: i32) -> (i32, i32) {
    %c0_i32 = arith.constant 0 : i32
    %c0_i32_0 = arith.constant 0 : i32
    return %arg1, %c0_i32 : i32, i32
  }
  func.func @transform_4(%arg0: i32, %arg1: i32) -> (i32, i32) {
    %c0_i32 = arith.constant 0 : i32
    %c0_i32_0 = arith.constant 0 : i32
    %c0_i32_1 = arith.constant 0 : i32
    return %c0_i32, %c0_i32_0 : i32, i32
  }
  func.func @transform_5(%arg0: i32, %arg1: i32) -> (i32, i32) {
    %c0_i32 = arith.constant 0 : i32
    %c0_i32_0 = arith.constant 0 : i32
    return %arg0, %c0_i32 : i32, i32
  }
}

</mosaic_0001>

<llo_original>
// kernel: linear_embedding.1
$region0: #{linear_embedding.1}
  #allocation0 [shape = 'u32[]', space=smem, size = 0x4, offset = 0x4, fixed_abs, tag = 'smem constant byte address 0x4 - core index']
  #allocation1 [shape = 'u32[144,128]{1,0:T(1,128)}', space=vmem, size = 0x12000, scoped, tag = 'internal scratch']
  #allocation2 [shape = 'f32[8,16]{1,0:T(8,128)}', space=vmem, size = 0x1000, scoped, tag = 'scratch operand']
  %s0 = inlined_call_operand.vmem [shape: f32[16,16], index: 0, kind: input, shape index: {}]
  %s1 = inlined_call_operand.vmem [shape: f32[16,32], index: 1, kind: input, shape index: {}]
  %s2 = inlined_call_operand.vmem [shape: f32[1,32], index: 2, kind: input, shape index: {}]
  %s3 = inlined_call_operand.vmem [shape: f32[32,16], index: 3, kind: input, shape index: {}]
  %s4 = inlined_call_operand.vmem [shape: f32[1,16], index: 4, kind: input, shape index: {}]
  %s5 = inlined_call_operand.hbm [shape: f32[16,16], index: 5, kind: output, shape index: {}]
  %s6 = sld [smem:[#allocation0]]
  $region61: #{linear_embedding.1} parent=0
    _
  %s8 = ssub.s32 1, %s6
  %s9 = scalar_select 0, %s8, %s6
  $region1: #{linear_embedding.1} parent=0
    #allocation3 [shape = 'u8[8192]{0}', space=vmem, size = 0x2000, scoped, tag = 'output window, operand 0']
    #allocation4 [shape = 's32[2]{0}', space=sflag, size = 0x8, scoped, tag = 'scoped memory for linear_embedding.1']
    %10 = vsyncpa [#allocation4], 0
    %s11 = scalar_lea.sflag [#allocation4], 1
    %12 = vsyncpa %s11, 0
    loop: start=0, step=1, limit=4
    $region2: #{linear_embedding.1} parent=1 // loop_pre_header
      _
    $region3: #{linear_embedding.1} parent=1 // loop_header
      %s14 = sphi 0, %s18
      %p15 = scmp.ge.s32.totalorder %s14, 4
      %s21 = sphi 0, %s33
      %s22 = sphi 0, %s29
      %s23 = sphi 0, %s21
      %s24 = sphi 0, %s22
      %s25 = sphi 0, %s23
      %s26 = sphi 0, %s24
      %s36 = sphi 0, %s38
      %s39 = sphi 0, %s36
      %s40 = sphi 0, %s39
      %s56 = sphi 0, %s40
      %s62 = sphi 0, %s64
      %s65 = sphi 0, %s62
      %s66 = sphi 0, %s65
      %s82 = sphi 0, %s66
      %s88 = sphi 0, %s90
      %s91 = sphi 0, %s88
      %s92 = sphi 0, %s91
      %s108 = sphi 0, %s92
      %s114 = sphi 0, %s116
      %s117 = sphi 0, %s114
      %s118 = sphi 0, %s117
      %s134 = sphi 0, %s118
      %s138 = sphi 0, %s138
      %s140 = sphi 0, %s138
      %s141 = sphi 0, %s140
      %s155 = sphi 0, %s141
      %s161 = sphi 0, %s163
      %s164 = sphi 0, %s161
      %s165 = sphi 0, %s164
      %s181 = sphi 0, %s165
    $region4: #{linear_embedding.1} parent=1 // loop_header_branch
      %17 = sbr.rel (%p15) target = $region8
    $region5: #{linear_embedding.1} parent=1 // loop_body
      %s19 = ssub.s32 %s14, 1
      %s20 = ssub.s32 %s14, 2
      %s27 = sadd.s32 1, %s22
      %p28 = scmp.ge.s32.totalorder %s27, 1
      %s29 = scalar_select %p28, 0, %s27
      %s30 = sadd.s32 1, %s21
      %s31 = scalar_select %p28, %s30, %s21
      %p32 = scmp.ge.s32.totalorder %s31, 2
      %s33 = scalar_select %p32, 0, %s31
      %s34 = ssub.s32 %s21, %s33
      %p35 = scmp.eq.s32.totalorder %s34, 0
      %s37 = sadd.s32 %s36, 1
      %s38 = scalar_select %p35, %s36, %s37
      %p41 = pneg %p35
      %p42 = scmp.eq.s32.totalorder %s14, 1
      %p43 = por %p41, %p42
      %p44 = scmp.ne.s32.totalorder %s36, %s39
      %p45 = scmp.eq.s32.totalorder %s14, 0
      %p46 = por %p44, %p45
      %p47 = scmp.ne.s32.totalorder %s36, %s39
      %p48 = scmp.eq.s32.totalorder %s19, 1
      %p49 = por %p47, %p48
      %p50 = scmp.ne.s32.totalorder %s39, %s40
      %p51 = scmp.eq.s32.totalorder %s19, 0
      %p52 = por %p50, %p51
      %p53 = scmp.ne.s32.totalorder %s39, %s40
      %p54 = scmp.eq.s32.totalorder %s20, 1
      %p55 = por %p53, %p54
      %p57 = scmp.ne.s32.totalorder %s40, %s56
      %p58 = scmp.eq.s32.totalorder %s20, 0
      %p59 = por %p57, %p58
      %s60 = ssub.s32 %s22, %s29
      %p61 = scmp.eq.s32.totalorder %s60, 0
      %s63 = sadd.s32 %s62, 1
      %s64 = scalar_select %p61, %s62, %s63
      %p67 = pneg %p61
      %p68 = scmp.eq.s32.totalorder %s14, 1
      %p69 = por %p67, %p68
      %p70 = scmp.ne.s32.totalorder %s62, %s65
      %p71 = scmp.eq.s32.totalorder %s14, 0
      %p72 = por %p70, %p71
      %p73 = scmp.ne.s32.totalorder %s62, %s65
      %p74 = scmp.eq.s32.totalorder %s19, 1
      %p75 = por %p73, %p74
      %p76 = scmp.ne.s32.totalorder %s65, %s66
      %p77 = scmp.eq.s32.totalorder %s19, 0
      %p78 = por %p76, %p77
      %p79 = scmp.ne.s32.totalorder %s65, %s66
      %p80 = scmp.eq.s32.totalorder %s20, 1
      %p81 = por %p79, %p80
      %p83 = scmp.ne.s32.totalorder %s66, %s82
      %p84 = scmp.eq.s32.totalorder %s20, 0
      %p85 = por %p83, %p84
      %s86 = ssub.s32 %s22, %s29
      %p87 = scmp.eq.s32.totalorder %s86, 0
      %s89 = sadd.s32 %s88, 1
      %s90 = scalar_select %p87, %s88, %s89
      %p93 = pneg %p87
      %p94 = scmp.eq.s32.totalorder %s14, 1
      %p95 = por %p93, %p94
      %p96 = scmp.ne.s32.totalorder %s88, %s91
      %p97 = scmp.eq.s32.totalorder %s14, 0
      %p98 = por %p96, %p97
      %p99 = scmp.ne.s32.totalorder %s88, %s91
      %p100 = scmp.eq.s32.totalorder %s19, 1
      %p101 = por %p99, %p100
      %p102 = scmp.ne.s32.totalorder %s91, %s92
      %p103 = scmp.eq.s32.totalorder %s19, 0
      %p104 = por %p102, %p103
      %p105 = scmp.ne.s32.totalorder %s91, %s92
      %p106 = scmp.eq.s32.totalorder %s20, 1
      %p107 = por %p105, %p106
      %p109 = scmp.ne.s32.totalorder %s92, %s108
      %p110 = scmp.eq.s32.totalorder %s20, 0
      %p111 = por %p109, %p110
      %s112 = ssub.s32 %s22, %s29
      %p113 = scmp.eq.s32.totalorder %s112, 0
      %s115 = sadd.s32 %s114, 1
      %s116 = scalar_select %p113, %s114, %s115
      %p119 = pneg %p113
      %p120 = scmp.eq.s32.totalorder %s14, 1
      %p121 = por %p119, %p120
      %p122 = scmp.ne.s32.totalorder %s114, %s117
      %p123 = scmp.eq.s32.totalorder %s14, 0
      %p124 = por %p122, %p123
      %p125 = scmp.ne.s32.totalorder %s114, %s117
      %p126 = scmp.eq.s32.totalorder %s19, 1
      %p127 = por %p125, %p126
      %p128 = scmp.ne.s32.totalorder %s117, %s118
      %p129 = scmp.eq.s32.totalorder %s19, 0
      %p130 = por %p128, %p129
      %p131 = scmp.ne.s32.totalorder %s117, %s118
      %p132 = scmp.eq.s32.totalorder %s20, 1
      %p133 = por %p131, %p132
      %p135 = scmp.ne.s32.totalorder %s118, %s134
      %p136 = scmp.eq.s32.totalorder %s20, 0
      %p137 = por %p135, %p136
      %s139 = sadd.s32 %s138, 1
      %p142 = scmp.eq.s32.totalorder %s14, 1
      %p143 = scmp.ne.s32.totalorder %s138, %s140
      %p144 = scmp.eq.s32.totalorder %s14, 0
      %p145 = por %p143, %p144
      %p146 = scmp.ne.s32.totalorder %s138, %s140
      %p147 = scmp.eq.s32.totalorder %s19, 1
      %p148 = por %p146, %p147
      %p149 = scmp.ne.s32.totalorder %s140, %s141
      %p150 = scmp.eq.s32.totalorder %s19, 0
      %p151 = por %p149, %p150
      %p152 = scmp.ne.s32.totalorder %s140, %s141
      %p153 = scmp.eq.s32.totalorder %s20, 1
      %p154 = por %p152, %p153
      %p156 = scmp.ne.s32.totalorder %s141, %s155
      %p157 = scmp.eq.s32.totalorder %s20, 0
      %p158 = por %p156, %p157
      %s159 = ssub.s32 %s21, %s33
      %p160 = scmp.eq.s32.totalorder %s159, 0
      %s162 = sadd.s32 %s161, 1
      %s163 = scalar_select %p160, %s161, %s162
      %p166 = pneg %p160
      %p167 = scmp.eq.s32.totalorder %s14, 1
      %p168 = por %p166, %p167
      %p169 = scmp.ne.s32.totalorder %s161, %s164
      %p170 = scmp.eq.s32.totalorder %s14, 0
      %p171 = por %p169, %p170
      %p172 = scmp.ne.s32.totalorder %s161, %s164
      %p173 = scmp.eq.s32.totalorder %s19, 1
      %p174 = por %p172, %p173
      %p175 = scmp.ne.s32.totalorder %s164, %s165
      %p176 = scmp.eq.s32.totalorder %s19, 0
      %p177 = por %p175, %p176
      %p178 = scmp.ne.s32.totalorder %s164, %s165
      %p179 = scmp.eq.s32.totalorder %s20, 1
      %p180 = por %p178, %p179
      %p182 = scmp.ne.s32.totalorder %s165, %s181
      %p183 = scmp.eq.s32.totalorder %s20, 0
      %p184 = por %p182, %p183
      %p185 = scmp.le.s32.totalorder 1, %s14
      %p186 = scmp.lt.s32.totalorder %s14, 3
      %p187 = pnand %p185, %p186
      %p188 = pneg %p187
      // Predicated region
      $region9: #{linear_embedding.1} parent=5 // pred_check
        _
      $region10: #{linear_embedding.1} parent=5 // pred_check_branch
        %190 = sbr.rel (%p187) target = $region12
      $region11: #{linear_embedding.1} parent=5 // pred_region
        %s191 = ssub.s32 %s14, 1
        // Predicated region
        $region13: #{linear_embedding.1} parent=11 // pred_check
          %p192 = pneg %p78
        $region14: #{linear_embedding.1} parent=11 // pred_check_branch
          %194 = sbr.rel (%p192) target = $region16
        $region15: #{linear_embedding.1} parent=11 // pred_region
          %p195 = scmp.lt.s32.totalorder %s24, 0
          %s196 = scalar_select %p195, %s24, 0
          %s197 = smul.addr %s196, 8
          %s198 = scalar_lea.vmem %s1, %s197
        $region16: #{linear_embedding.1} parent=11 // pred_fallthru
          _
        // Predicated region
        $region17: #{linear_embedding.1} parent=11 // pred_check
          %p199 = pneg %p104
        $region18: #{linear_embedding.1} parent=11 // pred_check_branch
          %201 = sbr.rel (%p199) target = $region20
        $region19: #{linear_embedding.1} parent=11 // pred_region
          %p202 = scmp.lt.s32.totalorder %s24, 0
          %s203 = scalar_select %p202, %s24, 0
          %s204 = scalar_lea.vmem %s2, %s203
        $region20: #{linear_embedding.1} parent=11 // pred_fallthru
          _
        // Predicated region
        $region21: #{linear_embedding.1} parent=11 // pred_check
          %p205 = pneg %p130
        $region22: #{linear_embedding.1} parent=11 // pred_check_branch
          %207 = sbr.rel (%p205) target = $region24
        $region23: #{linear_embedding.1} parent=11 // pred_region
          %s208 = smul.u32 4, %s24
          %p209 = scmp.lt.s32.totalorder %s208, 3
          %s210 = scalar_select %p209, %s208, 3
          %s211 = smul.addr %s210, 8
          %s212 = scalar_lea.vmem %s3, %s211
          %s213 = smul.u32 4, %s24
        $region24: #{linear_embedding.1} parent=11 // pred_fallthru
          _
        // Predicated region
        $region25: #{linear_embedding.1} parent=11 // pred_check
          %p214 = pneg %p151
        $region26: #{linear_embedding.1} parent=11 // pred_check_branch
          %216 = sbr.rel (%p214) target = $region28
        $region27: #{linear_embedding.1} parent=11 // pred_region
          _
        $region28: #{linear_embedding.1} parent=11 // pred_fallthru
          _
      $region12: #{linear_embedding.1} parent=5 // pred_fallthru
        _
      %p217 = scmp.lt.s32.totalorder %s14, 2
      // Predicated region
      $region29: #{linear_embedding.1} parent=5 // pred_check
        %p218 = pneg %p217
      $region30: #{linear_embedding.1} parent=5 // pred_check_branch
        %220 = sbr.rel (%p218) target = $region32
      $region31: #{linear_embedding.1} parent=5 // pred_region
        // Predicated region
        $region33: #{linear_embedding.1} parent=31 // pred_check
          %p221 = pneg %p46
        $region34: #{linear_embedding.1} parent=31 // pred_check_branch
          %223 = sbr.rel (%p221) target = $region36
        $region35: #{linear_embedding.1} parent=31 // pred_region
          %p224 = scmp.lt.s32.totalorder %s21, 1
          %s225 = scalar_select %p224, %s21, 1
          %s226 = smul.addr %s225, 8
          %s227 = scalar_lea.vmem %s0, %s226
        $region36: #{linear_embedding.1} parent=31 // pred_fallthru
          _
      $region32: #{linear_embedding.1} parent=5 // pred_fallthru
        _
      %p228 = scmp.le.s32.totalorder 1, %s14
      %p229 = scmp.lt.s32.totalorder %s14, 3
      %p230 = pnand %p228, %p229
      %p231 = pneg %p230
      // Predicated region
      $region37: #{linear_embedding.1} parent=5 // pred_check
        _
      $region38: #{linear_embedding.1} parent=5 // pred_check_branch
        %233 = sbr.rel (%p230) target = $region40
      $region39: #{linear_embedding.1} parent=5 // pred_region
        %s234 = ssub.s32 %s14, 1
        %p235 = scmp.lt.s32.totalorder %s23, 1
        %s236 = scalar_select %p235, %s23, 1
        %s237 = smul.addr %s236, 8
        %s238 = scalar_lea.vmem %s0, %s237
        %p239 = pneg %p52
        %p240 = pneg %p49
        %p241 = scmp.lt.s32.totalorder %s24, 0
        %s242 = scalar_select %p241, %s24, 0
        %s243 = smul.addr %s242, 8
        %s244 = scalar_lea.vmem %s1, %s243
        %p245 = pneg %p78
        %p246 = pneg %p75
        %p247 = scmp.lt.s32.totalorder %s24, 0
        %s248 = scalar_select %p247, %s24, 0
        %s249 = scalar_lea.vmem %s2, %s248
        %p250 = pneg %p104
        %p251 = pneg %p101
        %s252 = smul.u32 4, %s24
        %p253 = scmp.lt.s32.totalorder %s252, 3
        %s254 = scalar_select %p253, %s252, 3
        %s255 = smul.addr %s254, 8
        %s256 = scalar_lea.vmem %s3, %s255
        %p257 = pneg %p130
        %p258 = pneg %p127
        %p259 = pneg %p151
        %p260 = pneg %p148
        %p261 = pneg %p177
        %p262 = pneg %p174
        %s263 = sand.u32 %s164, 1
        %s264 = scalar_lea.sflag [#allocation4], %s263
        %s265 = sand.u32 %s164, 1
        %s266 = smul.addr %s265, 8
        %s267 = scalar_lea.vmem [#allocation3], %s266
        %p268 = scmp.lt.s32.totalorder %s23, 1
        %s269 = scalar_select %p268, %s23, 1
        %s270 = smul.addr %s269, 8
        %s271 = scalar_lea.vmem %s0, %s270
        %p272 = scmp.lt.s32.totalorder %s24, 0
        %s273 = scalar_select %p272, %s24, 0
        %s274 = smul.addr %s273, 8
        %s275 = scalar_lea.vmem %s1, %s274
        %p276 = scmp.lt.s32.totalorder %s24, 0
        %s277 = scalar_select %p276, %s24, 0
        %s278 = scalar_lea.vmem %s2, %s277
        %s279 = smul.u32 4, %s24
        %p280 = scmp.lt.s32.totalorder %s279, 3
        %s281 = scalar_select %p280, %s279, 3
        %s282 = smul.addr %s281, 8
        %s283 = scalar_lea.vmem %s3, %s282
        %s284 = smul.u32 4, %s24
        %p285 = scmp.eq.s32.totalorder %s24, 0
        // Predicated region
        $region41: #{linear_embedding.1} parent=39 // pred_check
          %p286 = pneg %p285
        $region42: #{linear_embedding.1} parent=39 // pred_check_branch
          %288 = sbr.rel (%p286) target = $region44
        $region43: #{linear_embedding.1} parent=39 // pred_region
          %vm289 = vcmask 130048
          %290 = vst.msk [vmem:[#allocation2] sm:$0xff] %vm289, 0.0
        $region44: #{linear_embedding.1} parent=39 // pred_fallthru
          _
        %v291 = vld [vmem:[%s271] sm:$0xff]
        %v292 = vld [vmem:[%s275] sm:$0xff]
        %v293 = vld [vmem:[%s275 + $0x8] sm:$0xff]
        %v294 = vld [vmem:[%s278] sm:$0x1]
        %v296 = vlaneseq
        %v297 = vshrl.u32 %v296, 7
        %v298 = vsub.s32 0, %v297
        %v299 = vrot.slane %v294, %v298
        %vm301 = vcmask 130048
        %v303 = vsel %vm301, %v291, 0
        %305 = vmatprep.subr.mxu0 0.0
        %306 = vmatpush1.msra.mxu0 0.0
        %307 = vmatprep.subr.mxu0 0.0
        %308 = vmatpush1.msra.mxu0 0.0
        %309 = vmatprep.subr.mxu0 0.0
        %310 = vmatpush1.msra.mxu0 0.0
        %311 = vmatprep.subr.mxu0 0.0
        %312 = vmatpush1.msra.mxu0 0.0
        %313 = vmatprep.subr.mxu0 0.0
        %314 = vmatpush1.msra.mxu0 0.0
        %315 = vmatprep.subr.mxu0 0.0
        %316 = vmatpush1.msra.mxu0 0.0
        %317 = vmatprep.subr.mxu0 0.0
        %318 = vmatpush1.msra.mxu0 0.0
        %319 = vmatprep.subr.mxu0 0.0
        %320 = vmatpush1.msra.mxu0 0.0
        %321 = vmatprep.subr.mxu0 0.0
        %322 = vmatpush1.msra.mxu0 0.0
        %323 = vmatprep.subr.mxu0 0.0
        %324 = vmatpush1.msra.mxu0 0.0
        %325 = vmatprep.subr.mxu0 0.0
        %326 = vmatpush1.msra.mxu0 0.0
        %327 = vmatprep.subr.mxu0 0.0
        %328 = vmatpush1.msra.mxu0 0.0
        %329 = vmatprep.subr.mxu0 0.0
        %330 = vmatpush1.msra.mxu0 0.0
        %331 = vmatprep.subr.mxu0 0.0
        %332 = vmatpush1.msra.mxu0 0.0
        %333 = vmatprep.subr.mxu0 0.0
        %334 = vmatpush1.msra.mxu0 %v293
        %335 = vmatprep.subr.mxu0 0.0
        %336 = vmatpush1.msra.mxu0 %v292
        %337 = vmatprep.subr.mxu0 0.0
        %338 = vmatpush2.msra.mxu0 0.0
        %339 = vmatprep.subr.mxu0 0.0
        %340 = vmatpush2.msra.mxu0 0.0
        %341 = vmatprep.subr.mxu0 0.0
        %342 = vmatpush2.msra.mxu0 0.0
        %343 = vmatprep.subr.mxu0 0.0
        %344 = vmatpush2.msra.mxu0 0.0
        %345 = vmatprep.subr.mxu0 0.0
        %346 = vmatpush2.msra.mxu0 0.0
        %347 = vmatprep.subr.mxu0 0.0
        %348 = vmatpush2.msra.mxu0 0.0
        %349 = vmatprep.subr.mxu0 0.0
        %350 = vmatpush2.msra.mxu0 0.0
        %351 = vmatprep.subr.mxu0 0.0
        %352 = vmatpush2.msra.mxu0 0.0
        %353 = vmatprep.subr.mxu0 0.0
        %354 = vmatpush2.msra.mxu0 0.0
        %355 = vmatprep.subr.mxu0 0.0
        %356 = vmatpush2.msra.mxu0 0.0
        %357 = vmatprep.subr.mxu0 0.0
        %358 = vmatpush2.msra.mxu0 0.0
        %359 = vmatprep.subr.mxu0 0.0
        %360 = vmatpush2.msra.mxu0 0.0
        %361 = vmatprep.subr.mxu0 0.0
        %362 = vmatpush2.msra.mxu0 0.0
        %363 = vmatprep.subr.mxu0 0.0
        %364 = vmatpush2.msra.mxu0 0.0
        %365 = vmatprep.subr.mxu0 0.0
        %366 = vmatpush2.msra.mxu0 0.0
        %367 = vmatprep.subr.mxu0 0.0
        %368 = vmatpush2.msra.mxu0 0.0
        %369 = vmatprep.mubr.f32.mxu0 0.0
        %370 = vmatmul.mubr.f32.gmra.mxu0 %v303
        %v371 = vpop.f32.mrf.mxu0
        %v372 = vadd.f32 %v299, %v371
        %v373 = vpop.f32.mrf.mxu0
        %374 = vdwg.mxu0
        %v375 = vmul.f32 %v372, 0.5
        %v376 = vmul.f32 %v372, 0.70710677
        %v377 = verf.f32.pop %v376
        %v378 = vadd.f32 %v377, 1.0
        %v379 = vmul.f32 %v375, %v378
        %v380 = vld [vmem:[#allocation2] sm:$0xff]
        %v381 = vld [vmem:[%s283] sm:$0xff]
        %v382 = vld [vmem:[%s283 + $0x8] sm:$0xff]
        %v383 = vld [vmem:[%s283 + $0x10] sm:$0xff]
        %v384 = vld [vmem:[%s283 + $0x18] sm:$0xff]
        %vm385 = vcmask 261120
        %v387 = vsel %vm385, %v379, 0
        %389 = vmatprep.subr.mxu0 0.0
        %390 = vmatpush1.msra.mxu0 0.0
        %391 = vmatprep.subr.mxu0 0.0
        %392 = vmatpush1.msra.mxu0 0.0
        %393 = vmatprep.subr.mxu0 0.0
        %394 = vmatpush1.msra.mxu0 0.0
        %395 = vmatprep.subr.mxu0 0.0
        %396 = vmatpush1.msra.mxu0 0.0
        %397 = vmatprep.subr.mxu0 0.0
        %398 = vmatpush1.msra.mxu0 0.0
        %399 = vmatprep.subr.mxu0 0.0
        %400 = vmatpush1.msra.mxu0 0.0
        %401 = vmatprep.subr.mxu0 0.0
        %402 = vmatpush1.msra.mxu0 0.0
        %403 = vmatprep.subr.mxu0 0.0
        %404 = vmatpush1.msra.mxu0 0.0
        %405 = vmatprep.subr.mxu0 0.0
        %406 = vmatpush1.msra.mxu0 0.0
        %407 = vmatprep.subr.mxu0 0.0
        %408 = vmatpush1.msra.mxu0 0.0
        %409 = vmatprep.subr.mxu0 0.0
        %410 = vmatpush1.msra.mxu0 0.0
        %411 = vmatprep.subr.mxu0 0.0
        %412 = vmatpush1.msra.mxu0 0.0
        %413 = vmatprep.subr.mxu0 0.0
        %414 = vmatpush1.msra.mxu0 %v384
        %415 = vmatprep.subr.mxu0 0.0
        %416 = vmatpush1.msra.mxu0 %v383
        %417 = vmatprep.subr.mxu0 0.0
        %418 = vmatpush1.msra.mxu0 %v382
        %419 = vmatprep.subr.mxu0 0.0
        %420 = vmatpush1.msra.mxu0 %v381
        %421 = vmatprep.subr.mxu0 0.0
        %422 = vmatpush2.msra.mxu0 0.0
        %423 = vmatprep.subr.mxu0 0.0
        %424 = vmatpush2.msra.mxu0 0.0
        %425 = vmatprep.subr.mxu0 0.0
        %426 = vmatpush2.msra.mxu0 0.0
        %427 = vmatprep.subr.mxu0 0.0
        %428 = vmatpush2.msra.mxu0 0.0
        %429 = vmatprep.subr.mxu0 0.0
        %430 = vmatpush2.msra.mxu0 0.0
        %431 = vmatprep.subr.mxu0 0.0
        %432 = vmatpush2.msra.mxu0 0.0
        %433 = vmatprep.subr.mxu0 0.0
        %434 = vmatpush2.msra.mxu0 0.0
        %435 = vmatprep.subr.mxu0 0.0
        %436 = vmatpush2.msra.mxu0 0.0
        %437 = vmatprep.subr.mxu0 0.0
        %438 = vmatpush2.msra.mxu0 0.0
        %439 = vmatprep.subr.mxu0 0.0
        %440 = vmatpush2.msra.mxu0 0.0
        %441 = vmatprep.subr.mxu0 0.0
        %442 = vmatpush2.msra.mxu0 0.0
        %443 = vmatprep.subr.mxu0 0.0
        %444 = vmatpush2.msra.mxu0 0.0
        %445 = vmatprep.subr.mxu0 0.0
        %446 = vmatpush2.msra.mxu0 0.0
        %447 = vmatprep.subr.mxu0 0.0
        %448 = vmatpush2.msra.mxu0 0.0
        %449 = vmatprep.subr.mxu0 0.0
        %450 = vmatpush2.msra.mxu0 0.0
        %451 = vmatprep.subr.mxu0 0.0
        %452 = vmatpush2.msra.mxu0 0.0
        %453 = vmatprep.mubr.f32.mxu0 0.0
        %454 = vmatmul.mubr.f32.gmra.mxu0 %v387
        %v455 = vpop.f32.mrf.mxu0
        %v456 = vadd.f32 0.0, %v455
        %v457 = vpop.f32.mrf.mxu0
        %458 = vdwg.mxu0
        %v459 = vadd.f32 %v380, %v456
        %460 = vst.msk [vmem:[#allocation2] sm:$0xff] %vm301, %v459
        // Predicated region
        $region45: #{linear_embedding.1} parent=39 // pred_check
          %p461 = pneg %p285
        $region46: #{linear_embedding.1} parent=39 // pred_check_branch
          %463 = sbr.rel (%p461) target = $region48
        $region47: #{linear_embedding.1} parent=39 // pred_region
          %v464 = vld [vmem:[#allocation2] sm:$0xff]
          %v465 = vld [vmem:[%s4] sm:$0x1]
          %v467 = vlaneseq
          %v468 = vshrl.u32 %v467, 7
          %v469 = vsub.s32 0, %v468
          %v470 = vrot.slane %v465, %v469
          %v472 = vadd.f32 %v464, %v470
          %473 = vst.msk [vmem:[%s267] sm:$0xff] %vm301, %v472
        $region48: #{linear_embedding.1} parent=39 // pred_fallthru
          _
        %s474 = sand.u32 %s164, 1
        %s475 = scalar_lea.sflag [#allocation4], %s474
        %s476 = sand.u32 %s164, 1
        %s477 = smul.addr %s476, 8
        %s478 = scalar_lea.vmem [#allocation3], %s477
        // Predicated region
        $region49: #{linear_embedding.1} parent=39 // pred_check
          %p479 = pneg %p174
        $region50: #{linear_embedding.1} parent=39 // pred_check_branch
          %481 = sbr.rel (%p479) target = $region52
        $region51: #{linear_embedding.1} parent=39 // pred_region
          %s483 = ssub.s32 128, 128
          %484 = vsyncadd %s475, %s483
          %s485 = smul.addr %s23, 128
          %s486 = scalar_lea.hbm %s5, %s485
          %s488 = sshll.u32 %s478, 4
          %s489 = int_to_ptr.vmem [resolvable:$true] %s488
          %491 = dma.vmem_to_hbm [thread:$0]  %s489, 128, %s486, %s475
        $region52: #{linear_embedding.1} parent=39 // pred_fallthru
          _
      $region40: #{linear_embedding.1} parent=5 // pred_fallthru
        _
      %p492 = scmp.le.s32.totalorder 2, %s14
      // Predicated region
      $region53: #{linear_embedding.1} parent=5 // pred_check
        %p493 = pneg %p492
      $region54: #{linear_embedding.1} parent=5 // pred_check_branch
        %495 = sbr.rel (%p493) target = $region56
      $region55: #{linear_embedding.1} parent=5 // pred_region
        %s496 = ssub.s32 %s14, 2
        // Predicated region
        $region57: #{linear_embedding.1} parent=55 // pred_check
          %p497 = pneg %p180
        $region58: #{linear_embedding.1} parent=55 // pred_check_branch
          %499 = sbr.rel (%p497) target = $region60
        $region59: #{linear_embedding.1} parent=55 // pred_region
          %s500 = sand.u32 %s165, 1
          %s501 = scalar_lea.sflag [#allocation4], %s500
          %s502 = sand.u32 %s165, 1
          %s503 = smul.addr %s502, 8
          %s504 = scalar_lea.vmem [#allocation3], %s503
          %505 = dma.done %s501, 128
        $region60: #{linear_embedding.1} parent=55 // pred_fallthru
          _
      $region56: #{linear_embedding.1} parent=5 // pred_fallthru
        _
    $region6: #{linear_embedding.1} parent=1 // loop_footer
      %s18 = sadd.s32 1, %s14
    $region7: #{linear_embedding.1} parent=1 // loop_footer_branch
      %13 = sbr.rel target = $region3
    $region8: #{linear_embedding.1} parent=1 // loop_exit
      _
    %506 = vsyncpa [#allocation4], 1
    %s507 = scalar_lea.sflag [#allocation4], 1
    %508 = vsyncpa %s507, 1

</llo_original>
